<compile_context>
chip_gen: v6e
topology: v6e:2x2x1
jax: 0.10.0
libtpu: 0.0.40
codegen_flags: <defaults>
</compile_context>

<pallas_src>
import functools

import jax
import jax.numpy as jnp
from jax.experimental import pallas as pl
from jax.experimental.pallas import tpu as pltpu


def _tlu_kernel(thr_ref, x_ref, o_ref):
    # thr_ref: (1,) float32 scalar in SMEM; x_ref / o_ref: VMEM tiles (1-D or 2-D).
    x = x_ref[...]
    t = thr_ref[0].astype(x.dtype)
    o_ref[...] = jnp.clip(x, -t, t)


def _round_up(a, b):
    return ((a + b - 1) // b) * b


def _round_down(a, b):
    return (a // b) * b


# Lane-dense candidates (multiples of 128), widest first.
_LANE_CANDIDATES = (2048, 1024, 512, 256, 128)


@functools.lru_cache(maxsize=1)
def _chip_traits():
    """Return (target_block_bytes, multi_tensorcore) for the local TPU generation."""
    kind = ""
    try:
        kind = jax.devices()[0].device_kind.lower()
    except Exception:  # pragma: no cover - fall back to conservative defaults
        pass
    # v4 / v5p (megacore) and v7x have 2 TensorCores per chip; v5e / v6e have 1.
    multi_tc = any(tag in kind for tag in ("v4", "v5p", "v7"))
    # v6e / v7x: 32 MiB scoped-VMEM default -> 4 MiB tiles (2 bufs x (in+out) = 16 MiB).
    # v5e (16 MiB scoped default) or unknown chip: stay at 2 MiB (8 MiB in flight).
    if any(tag in kind for tag in ("v6", "v7")):
        blk_bytes = 4 * 1024 * 1024
    else:
        blk_bytes = 2 * 1024 * 1024
    return blk_bytes, multi_tc


def tlu(x, threshold, *, in_place=False):
    """Elementwise clamp(x, -threshold, threshold) via Pallas.

    x: any shape / dtype (NCHW float feature maps expected from the PyTorch module).
    threshold: python scalar or traced 0-d value.
    in_place: set True only if the caller donates x (aliases input/output HBM).
    """
    orig_shape = x.shape
    n = x.size
    if n == 0:
        return x

    itemsize = jnp.dtype(x.dtype).itemsize
    # Sublane packing granularity: 8 rows/vreg at 32-bit, 16 at 16-bit, 32 at 8-bit.
    sub = max(8, 256 // (itemsize * 8))
    target_block_bytes, multi_tc = _chip_traits()

    thr = jnp.asarray(threshold, dtype=jnp.float32).reshape(1)
    smem_spec = pl.BlockSpec(memory_space=pltpu.MemorySpace.SMEM)
    compiler_params = pltpu.CompilerParams(dimension_semantics=("parallel",))
    io_alias = {1: 0} if in_place else {}

    lane = next((c for c in _LANE_CANDIDATES if n % c == 0), None)

    if lane is not None:
        # ---- aligned path: free metadata reshape to a lane-dense 2-D slab ----
        rows = n // lane
        block_rows = max(sub, _round_down(target_block_bytes // (lane * itemsize), sub))
        if rows <= block_rows:
            if multi_tc and rows >= 2 * sub:
                # Split into two grid steps so both TensorCores get rows.
                block_rows = _round_up(pl.cdiv(rows, 2), sub)
            else:
                # Single block spanning the full (possibly < sub) row dim.
                block_rows = rows
        grid = (pl.cdiv(rows, block_rows),)  # ragged last step -> Pallas boundary masking

        x2d = jnp.reshape(x, (rows, lane))
        out2d = pl.pallas_call(
            _tlu_kernel,
            out_shape=jax.ShapeDtypeStruct((rows, lane), x.dtype),
            grid=grid,
            in_specs=[
                smem_spec,                                           # threshold scalar
                pl.BlockSpec((block_rows, lane), lambda i: (i, 0)),  # x tile
            ],
            out_specs=pl.BlockSpec((block_rows, lane), lambda i: (i, 0)),
            compiler_params=compiler_params,
            input_output_aliases=io_alias,
        )(thr, x2d)
        return out2d.reshape(orig_shape)

    # ---- ragged path: no wrapper pad/slice.  Flat (n,) array, 1-D blocks; a
    # partial last grid step is handled by Pallas boundary masking. ----
    x1d = jnp.reshape(x, (n,))
    blk = max(sub * 128, _round_down(target_block_bytes // itemsize, sub * 128))
    if n <= blk:
        blk = n  # single block equal to the full dim: no masking, no padding
    grid = (pl.cdiv(n, blk),)

    out1d = pl.pallas_call(
        _tlu_kernel,
        out_shape=jax.ShapeDtypeStruct((n,), x.dtype),
        grid=grid,
        in_specs=[
            smem_spec,                                 # threshold scalar
            pl.BlockSpec((blk,), lambda i: (i,)),      # x chunk
        ],
        out_specs=pl.BlockSpec((blk,), lambda i: (i,)),
        compiler_params=compiler_params,
        input_output_aliases=io_alias,
    )(thr, x1d)
    return out1d.reshape(orig_shape)


if __name__ == "__main__":
    key = jax.random.PRNGKey(0)
    # Small NCHW input consistent with a conv-net feature map.
    B, C, H, W = 2, 4, 16, 16
    x = jax.random.normal(key, (B, C, H, W), dtype=jnp.float32) * 2.0

    threshold = 1.0
    out = jax.block_until_ready(tlu(x, threshold))

    ref = jnp.clip(x, -threshold, threshold)
    assert out.shape == x.shape
    assert out.dtype == x.dtype
    assert jnp.allclose(out, ref), "mismatch vs reference clamp"

    # Also exercise the ragged-size path (size not a multiple of 128) -> 1-D blocks.
    x2 = jax.random.normal(jax.random.PRNGKey(1), (3, 5, 7, 11), dtype=jnp.float32) * 2.0
    out2 = jax.block_until_ready(tlu(x2, 0.5))
    assert jnp.allclose(out2, jnp.clip(x2, -0.5, 0.5)), "mismatch on ragged path"

    # bf16 path exercises the dtype-aware sublane rounding.
    x3 = (jax.random.normal(jax.random.PRNGKey(2), (2, 8, 32, 32)) * 2.0).astype(jnp.bfloat16)
    out3 = jax.block_until_ready(tlu(x3, 1.0))
    assert jnp.allclose(out3.astype(jnp.float32),
                        jnp.clip(x3.astype(jnp.float32), -1.0, 1.0)), "mismatch on bf16 path"

    print("KERNEL_OK")
</pallas_src>

<mosaic_0001>
module attributes {stable_mosaic.version = 11 : i64} {
  func.func @_tlu_kernel(%arg0: i32, %arg1: memref<1xf32, #tpu.memory_space<smem>>, %arg2: memref<1x2048xf32, #tpu.memory_space<vmem>>, %arg3: memref<1x2048xf32, #tpu.memory_space<vmem>>) attributes {dimension_semantics = [#tpu.dimension_semantics<parallel>], iteration_bounds = array<i64: 1>, scalar_prefetch = 0 : i64, scratch_operands = 0 : i64, tpu.core_type = #tpu.core_type<tc>, window_params = [{transform_indices = @transform_0, window_bounds = array<i64: 1>}, {transform_indices = @transform_1, window_bounds = array<i64: 1, 2048>}, {transform_indices = @transform_2, window_bounds = array<i64: 1, 2048>}]} {
    %c0 = arith.constant 0 : index
    %c0_0 = arith.constant 0 : index
    %0 = vector.load %arg2[%c0, %c0_0] : memref<1x2048xf32, #tpu.memory_space<vmem>>, vector<1x2048xf32>
    %c0_1 = arith.constant 0 : index
    %1 = memref.load %arg1[%c0_1] : memref<1xf32, #tpu.memory_space<smem>>
    %cst = arith.constant 0.000000e+00 : f32
    %2 = arith.subf %cst, %1 : f32
    %3 = vector.broadcast %2 : f32 to vector<1x2048xf32>
    %4 = arith.maximumf %3, %0 : vector<1x2048xf32>
    %5 = vector.broadcast %1 : f32 to vector<1x2048xf32>
    %6 = arith.minimumf %5, %4 : vector<1x2048xf32>
    %c0_2 = arith.constant 0 : index
    %c0_3 = arith.constant 0 : index
    %7 = vector.load %arg3[%c0_2, %c0_3] : memref<1x2048xf32, #tpu.memory_space<vmem>>, vector<1x2048xf32>
    tpu.vector_store %arg3[%c0_2, %c0_3], %6 {strides = array<i32>} : memref<1x2048xf32, #tpu.memory_space<vmem>>, vector<1x2048xf32>,
    return
  }
  func.func @transform_0(%arg0: i32) -> i32 {
    %c0_i32 = arith.constant 0 : i32
    %c0_i32_0 = arith.constant 0 : i32
    return %c0_i32 : i32
  }
  func.func @transform_1(%arg0: i32) -> (i32, i32) {
    %c0_i32 = arith.constant 0 : i32
    %c0_i32_0 = arith.constant 0 : i32
    return %arg0, %c0_i32 : i32, i32
  }
  func.func @transform_2(%arg0: i32) -> (i32, i32) {
    %c0_i32 = arith.constant 0 : i32
    %c0_i32_0 = arith.constant 0 : i32
    return %arg0, %c0_i32 : i32, i32
  }
}

</mosaic_0001>

<llo_original>
// kernel: tpu_custom_call.1
$region0: #{tpu_custom_call.1}
  #allocation0 [shape = 'u32[]', space=smem, size = 0x4, offset = 0x4, fixed_abs, tag = 'smem constant byte address 0x4 - core index']
  #allocation1 [shape = 'u32[144,128]{1,0:T(1,128)}', space=vmem, size = 0x12000, scoped, tag = 'internal scratch']
  #allocation2 [shape = 'f32[1]{0:T(128)S(6)}', space=smem, size = 0x200, scoped, tag = 'scoped memory for tpu_custom_call.1']
  %s0 = inlined_call_operand.<no memory space> [shape: f32[1], index: 0, kind: input, shape index: {}]
  %s1 = inlined_call_operand.hbm [shape: f32[1,2048], index: 1, kind: input, shape index: {}]
  %s2 = inlined_call_operand.hbm [shape: f32[1,2048], index: 2, kind: output, shape index: {}]
  %s3 = sld [smem:[#allocation0]]
  $region22: #{tpu_custom_call.1} parent=0
    _
  %s5 = ssub.s32 1, %s3
  %s6 = scalar_select 0, %s5, %s3
  %7 = sst [smem:[#allocation2]] %s0
  $region1: #{tpu_custom_call.1} parent=0
    #allocation3 [shape = 'u8[8192]{0}', space=vmem, size = 0x2000, scoped, tag = 'input window, operand 1, single buffered']
    #allocation4 [shape = 's32[1]{0}', space=sflag, size = 0x4, scoped, tag = 'scoped memory for tpu_custom_call.1']
    #allocation5 [shape = 's32[1]{0}', space=sflag, size = 0x4, scoped, tag = 'scoped memory for tpu_custom_call.1']
    #allocation6 [shape = 'u8[8192]{0}', space=vmem, size = 0x2000, scoped, tag = 'output window, operand 0, single buffered']
    %8 = vsyncpa [#allocation4], 0
    %9 = vsyncpa [#allocation5], 0
    // Predicated region
    $region2: #{tpu_custom_call.1} parent=1 // pred_check
      _
    $region3: #{tpu_custom_call.1} parent=1 // pred_check_branch
      %11 = sbr.rel (0) target = $region5
    $region4: #{tpu_custom_call.1} parent=1 // pred_region
      _
    $region5: #{tpu_custom_call.1} parent=1 // pred_fallthru
      _
    // Predicated region
    $region6: #{tpu_custom_call.1} parent=1 // pred_check
      _
    $region7: #{tpu_custom_call.1} parent=1 // pred_check_branch
      %13 = sbr.rel (0) target = $region9
    $region8: #{tpu_custom_call.1} parent=1 // pred_region
      %s15 = ssub.s32 256, 256
      %16 = vsyncadd [#allocation4], %s15
      %s18 = sshll.u32 [#allocation3], 4
      %s19 = int_to_ptr.vmem [resolvable:$true] %s18
      %21 = dma.hbm_to_vmem [thread:$0]  %s1, 256, %s19, [#allocation4]
    $region9: #{tpu_custom_call.1} parent=1 // pred_fallthru
      _
    // Predicated region
    $region10: #{tpu_custom_call.1} parent=1 // pred_check
      _
    $region11: #{tpu_custom_call.1} parent=1 // pred_check_branch
      %23 = sbr.rel (0) target = $region13
    $region12: #{tpu_custom_call.1} parent=1 // pred_region
      %24 = dma.done [#allocation4], 256
    $region13: #{tpu_custom_call.1} parent=1 // pred_fallthru
      _
    %v25 = vld [vmem:[#allocation3] sm:$0xff]
    %v26 = vld [vmem:[#allocation3 + $0x8] sm:$0xff]
    %s27 = sld [smem:[#allocation2]]
    %s28 = ssub.f32 0.0, %s27
    %v29 = vstv %s28
    %v30 = vmax.f32 %v29, %v25
    %v31 = vmax.f32 %v29, %v26
    %v32 = vstv %s27
    %v33 = vmin.f32 %v32, %v30
    %v34 = vmin.f32 %v32, %v31
    %35 = vst [vmem:[#allocation6] sm:$0xff] %v33
    %36 = vst [vmem:[#allocation6 + $0x8] sm:$0xff] %v34
    // Predicated region
    $region14: #{tpu_custom_call.1} parent=1 // pred_check
      _
    $region15: #{tpu_custom_call.1} parent=1 // pred_check_branch
      %38 = sbr.rel (0) target = $region17
    $region16: #{tpu_custom_call.1} parent=1 // pred_region
      %s40 = ssub.s32 256, 256
      %41 = vsyncadd [#allocation5], %s40
      %s43 = sshll.u32 [#allocation6], 4
      %s44 = int_to_ptr.vmem [resolvable:$true] %s43
      %46 = dma.vmem_to_hbm [thread:$0]  %s44, 256, %s2, [#allocation5]
    $region17: #{tpu_custom_call.1} parent=1 // pred_fallthru
      _
    // Predicated region
    $region18: #{tpu_custom_call.1} parent=1 // pred_check
      _
    $region19: #{tpu_custom_call.1} parent=1 // pred_check_branch
      %48 = sbr.rel (0) target = $region21
    $region20: #{tpu_custom_call.1} parent=1 // pred_region
      %49 = dma.done [#allocation5], 256
    $region21: #{tpu_custom_call.1} parent=1 // pred_fallthru
      _
    %50 = vsyncpa [#allocation4], 1
    %51 = vsyncpa [#allocation5], 1

</llo_original>
